<compile_context>
chip_gen: v6e
topology: v6e:2x2x1
jax: 0.10.0
libtpu: 0.0.40
codegen_flags: <defaults>
</compile_context>

<pallas_src>
import jax
import jax.numpy as jnp
from jax.experimental import pallas as pl
from jax.experimental.pallas import tpu as pltpu

_NEG_BIG = -1e30  # bias fill for padded lanes -> exp() underflows to exactly 0


def _lr_fused_kernel(x_ref, wt_ref, b_ref, o_ref):
    # Single fused matmul: (TB, in) @ (in, out_pad), f32 accumulation on MXU.
    h = jnp.dot(x_ref[...], wt_ref[...], preferred_element_type=jnp.float32)
    h = h + b_ref[...]                      # bias add in f32 (pad lanes -1e30)
    # Numerically stable softmax over the last (lane) axis.
    m = jnp.max(h, axis=-1, keepdims=True)
    e = jnp.exp(h - m)                      # padded lanes become exactly 0
    denom = jnp.sum(e, axis=-1, keepdims=True)
    o_ref[...] = (e * pl.reciprocal(denom, approx=True)).astype(o_ref.dtype)


def _round_up(n, m):
    return ((n + m - 1) // m) * m


def lr_forward(x, w1, b1, w2, b2, w3, b3, *, block_batch=512,
               compute_dtype=jnp.bfloat16):
    """Fused 3-Linear + softmax forward via a single Pallas kernel.

    Layer fusion, weight pre-transpose, lane padding and dtype casts happen in
    plain jnp outside pallas_call (trace-time / cheap XLA ops); the kernel is
    one matmul + bias + softmax per batch tile.
    """
    batch, in_1 = x.shape
    out_3 = w3.shape[0]

    # ---- Algebraic fusion of the three bias-only Linears (exact up to f32
    #      rounding):  h = x @ (W3 W2 W1)^T + (W3 W2 b1 + W3 b2 + b3)
    w32 = w3 @ w2                                     # (out_3, out_1)
    wf = w32 @ w1                                     # (out_3, in_1)
    bf = w32 @ b1 + w3 @ b2 + b3                      # (out_3,)

    # Pre-transposed, lane-padded weight (in_1, out_pad); padded bias lanes get
    # -1e30 so they vanish under softmax.
    out_pad = _round_up(out_3, 128)
    wt = jnp.zeros((in_1, out_pad), jnp.float32).at[:, :out_3].set(wf.T)
    b_pad = jnp.full((1, out_pad), _NEG_BIG, jnp.float32).at[0, :out_3].set(bf)

    # Batch tiling: sublane-aligned tiles, zero-pad extra rows, slice them off.
    tb = min(block_batch, _round_up(batch, 8))
    batch_pad = _round_up(batch, tb)
    x_pad = jnp.zeros((batch_pad, in_1), x.dtype).at[:batch, :].set(x)

    # bf16 MXU operands, f32 accumulate (bias/softmax stay f32 in-kernel).
    x_c = x_pad.astype(compute_dtype)
    wt_c = wt.astype(compute_dtype)

    out = pl.pallas_call(
        _lr_fused_kernel,
        out_shape=jax.ShapeDtypeStruct((batch_pad, out_pad), jnp.float32),
        grid=(batch_pad // tb,),
        in_specs=[
            pl.BlockSpec((tb, in_1), lambda i: (i, 0)),        # x tile per step
            pl.BlockSpec((in_1, out_pad), lambda i: (0, 0)),   # resident weight
            pl.BlockSpec((1, out_pad), lambda i: (0, 0)),      # resident bias
        ],
        out_specs=pl.BlockSpec((tb, out_pad), lambda i: (i, 0)),
        compiler_params=pltpu.CompilerParams(
            dimension_semantics=("parallel",)),                 # 2 TCs on v7x
    )(x_c, wt_c, b_pad)

    return out[:batch, :out_3]


def _ref_forward(x, w1, b1, w2, b2, w3, b3):
    h = x @ w1.T + b1
    h = h @ w2.T + b2
    h = h @ w3.T + b3
    return jax.nn.softmax(h, axis=-1)


if __name__ == "__main__":
    # Small shapes consistent with the module: chained Linears require
    # out_1 == in_2 and out_2 == in_3.
    batch = 8
    in_1, out_1 = 32, 64
    in_2, out_2 = 64, 32
    in_3, out_3 = 32, 16

    key = jax.random.PRNGKey(0)
    kx, k1, k2, k3, kb1, kb2, kb3 = jax.random.split(key, 7)

    x = jax.random.normal(kx, (batch, in_1), dtype=jnp.float32)

    # Deterministic PyTorch-style init: U(-1/sqrt(fan_in), 1/sqrt(fan_in))
    def init_linear(kw, kb, fan_in, fan_out):
        bound = 1.0 / jnp.sqrt(float(fan_in))
        w = jax.random.uniform(kw, (fan_out, fan_in), jnp.float32, -bound, bound)
        b = jax.random.uniform(kb, (fan_out,), jnp.float32, -bound, bound)
        return w, b

    w1, b1 = init_linear(k1, kb1, in_1, out_1)
    w2, b2 = init_linear(k2, kb2, in_2, out_2)
    w3, b3 = init_linear(k3, kb3, in_3, out_3)

    out = lr_forward(x, w1, b1, w2, b2, w3, b3)
    out = jax.block_until_ready(out)

    ref = _ref_forward(x, w1, b1, w2, b2, w3, b3)
    assert out.shape == (batch, out_3)
    # Tolerance loosened for bf16 matmul operands + approx reciprocal
    # (error is at the 1e-4..1e-3 level post-softmax).
    assert jnp.allclose(out, ref, atol=5e-3, rtol=0.0), "mismatch vs reference"

    print("KERNEL_OK")
</pallas_src>

<mosaic_0001>
module attributes {stable_mosaic.version = 11 : i64} {
  func.func @_lr_fused_kernel(%arg0: i32, %arg1: memref<8x32xbf16, #tpu.memory_space<vmem>>, %arg2: memref<32x128xbf16, #tpu.memory_space<vmem>>, %arg3: memref<1x128xf32, #tpu.memory_space<vmem>>, %arg4: memref<8x128xf32, #tpu.memory_space<vmem>>) attributes {dimension_semantics = [#tpu.dimension_semantics<parallel>], iteration_bounds = array<i64: 1>, scalar_prefetch = 0 : i64, scratch_operands = 0 : i64, tpu.core_type = #tpu.core_type<tc>, window_params = [{transform_indices = @transform_0, window_bounds = array<i64: 8, 32>}, {pipeline_mode = #tpu.pipeline_mode<synchronous>, transform_indices = @transform_1, window_bounds = array<i64: 32, 128>}, {pipeline_mode = #tpu.pipeline_mode<synchronous>, transform_indices = @transform_2, window_bounds = array<i64: 1, 128>}, {transform_indices = @transform_3, window_bounds = array<i64: 8, 128>}]} {
    %c0 = arith.constant 0 : index
    %c0_0 = arith.constant 0 : index
    %0 = vector.load %arg1[%c0, %c0_0] : memref<8x32xbf16, #tpu.memory_space<vmem>>, vector<8x32xbf16>
    %c0_1 = arith.constant 0 : index
    %c0_2 = arith.constant 0 : index
    %1 = vector.load %arg2[%c0_1, %c0_2] : memref<32x128xbf16, #tpu.memory_space<vmem>>, vector<32x128xbf16>
    %cst = arith.constant dense<0.000000e+00> : vector<8x128xf32>
    %2 = tpu.matmul %0, %1, %cst {dimension_numbers = #tpu.dot_dimension_numbers<[1], [0], [0], [1], [0, 0, 1, 1], [], []>} : vector<8x32xbf16>, vector<32x128xbf16>, vector<8x128xf32> -> vector<8x128xf32>
    %c0_3 = arith.constant 0 : index
    %c0_4 = arith.constant 0 : index
    %3 = vector.load %arg3[%c0_3, %c0_4] : memref<1x128xf32, #tpu.memory_space<vmem>>, vector<1x128xf32>
    %4 = vector.broadcast %3 : vector<1x128xf32> to vector<8x128xf32>
    %5 = arith.addf %2, %4 : vector<8x128xf32>
    %cst_5 = arith.constant dense<0xFF800000> : vector<8xf32>
    %6 = vector.multi_reduction <maximumf>, %5, %cst_5 [1] : vector<8x128xf32> to vector<8xf32>
    %7 = vector.shape_cast %6 : vector<8xf32> to vector<8x1xf32>
    %8 = vector.broadcast %7 : vector<8x1xf32> to vector<8x128xf32>
    %9 = arith.subf %5, %8 : vector<8x128xf32>
    %10 = math.exp %9 : vector<8x128xf32>
    %cst_6 = arith.constant dense<0.000000e+00> : vector<8xf32>
    %11 = vector.multi_reduction <add>, %10, %cst_6 [1] : vector<8x128xf32> to vector<8xf32>
    %12 = vector.shape_cast %11 : vector<8xf32> to vector<8x1xf32>
    %13 = tpu.reciprocal %12 {approx = true} : vector<8x1xf32> -> vector<8x1xf32>
    %14 = vector.broadcast %13 : vector<8x1xf32> to vector<8x128xf32>
    %15 = arith.mulf %10, %14 : vector<8x128xf32>
    %c0_7 = arith.constant 0 : index
    %c0_8 = arith.constant 0 : index
    %16 = vector.load %arg4[%c0_7, %c0_8] : memref<8x128xf32, #tpu.memory_space<vmem>>, vector<8x128xf32>
    tpu.vector_store %arg4[%c0_7, %c0_8], %15 {strides = array<i32>} : memref<8x128xf32, #tpu.memory_space<vmem>>, vector<8x128xf32>,
    return
  }
  func.func @transform_0(%arg0: i32) -> (i32, i32) {
    %c0_i32 = arith.constant 0 : i32
    %c0_i32_0 = arith.constant 0 : i32
    return %arg0, %c0_i32 : i32, i32
  }
  func.func @transform_1(%arg0: i32) -> (i32, i32) {
    %c0_i32 = arith.constant 0 : i32
    %c0_i32_0 = arith.constant 0 : i32
    %c0_i32_1 = arith.constant 0 : i32
    return %c0_i32, %c0_i32_0 : i32, i32
  }
  func.func @transform_2(%arg0: i32) -> (i32, i32) {
    %c0_i32 = arith.constant 0 : i32
    %c0_i32_0 = arith.constant 0 : i32
    %c0_i32_1 = arith.constant 0 : i32
    return %c0_i32, %c0_i32_0 : i32, i32
  }
  func.func @transform_3(%arg0: i32) -> (i32, i32) {
    %c0_i32 = arith.constant 0 : i32
    %c0_i32_0 = arith.constant 0 : i32
    return %arg0, %c0_i32 : i32, i32
  }
}

</mosaic_0001>

<llo_original>
// kernel: tpu_custom_call.1
$region0: #{tpu_custom_call.1}
  #allocation0 [shape = 'u32[]', space=smem, size = 0x4, offset = 0x4, fixed_abs, tag = 'smem constant byte address 0x4 - core index']
  #allocation1 [shape = 'u32[144,128]{1,0:T(1,128)}', space=vmem, size = 0x12000, scoped, tag = 'internal scratch']
  %s0 = inlined_call_operand.hbm [shape: bf16[8,32], index: 0, kind: input, shape index: {}]
  %s1 = inlined_call_operand.hbm [shape: bf16[32,128], index: 1, kind: input, shape index: {}]
  %s2 = inlined_call_operand.vmem [shape: f32[1,128], index: 2, kind: input, shape index: {}]
  %s3 = inlined_call_operand.hbm [shape: f32[8,128], index: 3, kind: output, shape index: {}]
  %s4 = sld [smem:[#allocation0]]
  $region30: #{tpu_custom_call.1} parent=0
    _
  %s6 = ssub.s32 1, %s4
  %s7 = scalar_select 0, %s6, %s4
  $region1: #{tpu_custom_call.1} parent=0
    #allocation2 [shape = 'u8[2048]{0}', space=vmem, size = 0x800, scoped, tag = 'input window, operand 0, single buffered']
    #allocation3 [shape = 's32[1]{0}', space=sflag, size = 0x4, scoped, tag = 'scoped memory for tpu_custom_call.1']
    #allocation4 [shape = 's32[1]{0}', space=sflag, size = 0x4, scoped, tag = 'scoped memory for tpu_custom_call.1']
    #allocation5 [shape = 'u8[8192]{0}', space=vmem, size = 0x2000, scoped, tag = 'input window, operand 1, single buffered']
    #allocation6 [shape = 's32[1]{0}', space=sflag, size = 0x4, scoped, tag = 'scoped memory for tpu_custom_call.1']
    #allocation7 [shape = 'u8[4096]{0}', space=vmem, size = 0x1000, scoped, tag = 'output window, operand 0, single buffered']
    %8 = vsyncpa [#allocation3], 0
    %9 = vsyncpa [#allocation6], 0
    %10 = vsyncpa [#allocation4], 0
    // Predicated region
    $region2: #{tpu_custom_call.1} parent=1 // pred_check
      _
    $region3: #{tpu_custom_call.1} parent=1 // pred_check_branch
      %12 = sbr.rel (0) target = $region5
    $region4: #{tpu_custom_call.1} parent=1 // pred_region
      %s14 = ssub.s32 64, 64
      %15 = vsyncadd [#allocation3], %s14
      %s17 = sshll.u32 [#allocation2], 4
      %s18 = int_to_ptr.vmem [resolvable:$true] %s17
      %20 = dma.hbm_to_vmem [thread:$0]  %s0, 64, %s18, [#allocation3]
    $region5: #{tpu_custom_call.1} parent=1 // pred_fallthru
      _
    // Predicated region
    $region6: #{tpu_custom_call.1} parent=1 // pred_check
      _
    $region7: #{tpu_custom_call.1} parent=1 // pred_check_branch
      %22 = sbr.rel (0) target = $region9
    $region8: #{tpu_custom_call.1} parent=1 // pred_region
      %s24 = ssub.s32 256, 256
      %25 = vsyncadd [#allocation6], %s24
      %s26 = sshll.u32 [#allocation5], 4
      %s27 = int_to_ptr.vmem [resolvable:$true] %s26
      %32 = dma.hbm_to_vmem [thread:$0]  %s1, 256, %s27, [#allocation6], 64, 64, 4
    $region9: #{tpu_custom_call.1} parent=1 // pred_fallthru
      _
    // Predicated region
    $region10: #{tpu_custom_call.1} parent=1 // pred_check
      _
    $region11: #{tpu_custom_call.1} parent=1 // pred_check_branch
      %34 = sbr.rel (0) target = $region13
    $region12: #{tpu_custom_call.1} parent=1 // pred_region
      _
    $region13: #{tpu_custom_call.1} parent=1 // pred_fallthru
      _
    // Predicated region
    $region14: #{tpu_custom_call.1} parent=1 // pred_check
      _
    $region15: #{tpu_custom_call.1} parent=1 // pred_check_branch
      %36 = sbr.rel (0) target = $region17
    $region16: #{tpu_custom_call.1} parent=1 // pred_region
      %37 = dma.done [#allocation3], 64
    $region17: #{tpu_custom_call.1} parent=1 // pred_fallthru
      _
    // Predicated region
    $region18: #{tpu_custom_call.1} parent=1 // pred_check
      _
    $region19: #{tpu_custom_call.1} parent=1 // pred_check_branch
      %39 = sbr.rel (0) target = $region21
    $region20: #{tpu_custom_call.1} parent=1 // pred_region
      %40 = dma.done [#allocation6], 256
    $region21: #{tpu_custom_call.1} parent=1 // pred_fallthru
      _
    %v42 = vld [vmem:[#allocation2] sm:$0xf]
    %v43 = vld [vmem:[#allocation5] sm:$0xf]
    %v44 = vld [vmem:[#allocation5 + $0x4] sm:$0xf]
    %v45 = vld [vmem:[#allocation5 + $0x8] sm:$0xf]
    %v46 = vld [vmem:[#allocation5 + $0xc] sm:$0xf]
    %v47 = vld [vmem:[%s2] sm:$0x1]
    %v49 = vlaneseq
    %v50 = vshrl.u32 %v49, 7
    %v51 = vsub.s32 0, %v50
    %v52 = vrot.slane %v47, %v51
    %v58 = vunpack.c.l.b16 %v43
    %v59 = vunpack.c.l.b16 %v44
    %v60 = vunpack.c.l.b16 %v45
    %v61 = vunpack.c.l.b16 %v46
    %v62 = vpack.c.b16 %v59, %v58
    %v63 = vpack.c.b16 %v61, %v60
    %vm66 = vcmask 261120
    %v68 = vsel %vm66, %v42, 0
    %70 = vmatprep.subr.bf16.mxu0 0
    %71 = vmatpush1.bf16.msra.mxu0 0
    %72 = vmatprep.subr.bf16.mxu0 0
    %73 = vmatpush1.bf16.msra.mxu0 0
    %74 = vmatprep.subr.bf16.mxu0 0
    %75 = vmatpush1.bf16.msra.mxu0 0
    %76 = vmatprep.subr.bf16.mxu0 0
    %77 = vmatpush1.bf16.msra.mxu0 0
    %78 = vmatprep.subr.bf16.mxu0 0
    %79 = vmatpush1.bf16.msra.mxu0 0
    %80 = vmatprep.subr.bf16.mxu0 0
    %81 = vmatpush1.bf16.msra.mxu0 0
    %82 = vmatprep.subr.bf16.mxu0 0
    %83 = vmatpush1.bf16.msra.mxu0 %v63
    %84 = vmatprep.subr.bf16.mxu0 0
    %85 = vmatpush1.bf16.msra.mxu0 %v62
    %86 = vmatprep.subr.bf16.mxu0 0
    %87 = vmatpush2.bf16.msra.mxu0 0
    %88 = vmatprep.subr.bf16.mxu0 0
    %89 = vmatpush2.bf16.msra.mxu0 0
    %90 = vmatprep.subr.bf16.mxu0 0
    %91 = vmatpush2.bf16.msra.mxu0 0
    %92 = vmatprep.subr.bf16.mxu0 0
    %93 = vmatpush2.bf16.msra.mxu0 0
    %94 = vmatprep.subr.bf16.mxu0 0
    %95 = vmatpush2.bf16.msra.mxu0 0
    %96 = vmatprep.subr.bf16.mxu0 0
    %97 = vmatpush2.bf16.msra.mxu0 0
    %98 = vmatprep.subr.bf16.mxu0 0
    %99 = vmatpush2.bf16.msra.mxu0 0
    %100 = vmatprep.subr.bf16.mxu0 0
    %101 = vmatpush2.bf16.msra.mxu0 0
    %102 = vmatprep.mubr.bf16.mxu0 0
    %103 = vmatmul.mubr.bf16.gmra.mxu0 %v68
    %v104 = vpop.f32.mrf.mxu0
    %v105 = vadd.f32 %v52, %v104
    %v106 = vpop.f32.mrf.mxu0
    %v107 = vpop.f32.mrf.mxu0
    %v108 = vpop.f32.mrf.mxu0
    %109 = vdwg.mxu0
    %110 = vmax.xlane.f32.xlu0 %v105
    %v111 = vpop.xlane.xlu0 %110
    %v112 = vsub.f32 %v105, %v111
    %v113 = vmul.f32 %v112, 1.442695
    %v114 = vpow.pop %v113
    %115 = vadd.xlane.f32.xlu0 %v114
    %v116 = vpop.xlane.xlu0 %115
    %v117 = vrcp.pop %v116
    %v118 = vmul.f32 %v114, %v117
    %119 = vst [vmem:[#allocation7] sm:$0xff] %v118
    // Predicated region
    $region22: #{tpu_custom_call.1} parent=1 // pred_check
      _
    $region23: #{tpu_custom_call.1} parent=1 // pred_check_branch
      %121 = sbr.rel (0) target = $region25
    $region24: #{tpu_custom_call.1} parent=1 // pred_region
      %s123 = ssub.s32 128, 128
      %124 = vsyncadd [#allocation4], %s123
      %s126 = sshll.u32 [#allocation7], 4
      %s127 = int_to_ptr.vmem [resolvable:$true] %s126
      %129 = dma.vmem_to_hbm [thread:$0]  %s127, 128, %s3, [#allocation4]
    $region25: #{tpu_custom_call.1} parent=1 // pred_fallthru
      _
    // Predicated region
    $region26: #{tpu_custom_call.1} parent=1 // pred_check
      _
    $region27: #{tpu_custom_call.1} parent=1 // pred_check_branch
      %131 = sbr.rel (0) target = $region29
    $region28: #{tpu_custom_call.1} parent=1 // pred_region
      %132 = dma.done [#allocation4], 128
    $region29: #{tpu_custom_call.1} parent=1 // pred_fallthru
      _
    %133 = vsyncpa [#allocation3], 1
    %134 = vsyncpa [#allocation6], 1
    %135 = vsyncpa [#allocation4], 1

</llo_original>
